<compile_context>
chip_gen: v7x
topology: tpu7x:2x2x1
jax: 0.10.0
libtpu: 0.0.40
codegen_flags: <defaults>
</compile_context>

<pallas_src>
import jax
import jax.numpy as jnp
from jax.experimental import pallas as pl
from jax.experimental.pallas import tpu as pltpu

_MIB = 1 << 20
_MIN_SPLIT_BYTES = 1 * _MIB      # split slabs above this so both TCs get work
_ROW_MULT = 32                   # dense sublane packing for f32/bf16/int8 alike


def _relu_kernel(x_ref, o_ref):
    # One VPU max per vreg; purely elementwise on the current VMEM tile.
    o_ref[...] = jnp.maximum(x_ref[...], jnp.zeros((), dtype=x_ref.dtype))


def _default_block_bytes() -> int:
    """Pick a target block size per TPU generation (conservative fallback)."""
    try:
        vmem = pltpu.get_tpu_info().vmem_capacity_bytes
        if vmem <= (64 << 20):
            # v7x-class: 64 MiB VMEM/TC, ~3.2 TB/s HBM -> amortize per-step overhead.
            return 8 * _MIB
        # v5e/v6e-class: 128 MiB VMEM; explicit vmem_limit_bytes keeps it safe on v5e.
        return 4 * _MIB
    except Exception:
        return 2 * _MIB          # unknown part: fits every default scoped-VMEM limit


def _pick_width(n: int, itemsize: int):
    """Widest lane-dense width (multiple of 128) that keeps sublanes dense."""
    min_rows = max(8, 32 // max(itemsize, 1))   # 8 for f32, 16 for bf16, 32 for int8
    for cand in (4096, 2048, 1024, 512, 256, 128):
        if n % cand == 0 and (n // cand) >= min_rows:
            return cand
    for cand in (4096, 2048, 1024, 512, 256, 128):
        if n % cand == 0:
            return cand
    return None


def _pick_blocking(rows: int, width: int, itemsize: int, target_block_bytes: int):
    """Return (block_rows, grid_n) for the row axis."""
    slab_bytes = rows * width * itemsize
    bytes_per_row = width * itemsize
    target_rows = max(_ROW_MULT,
                      (target_block_bytes // bytes_per_row) // _ROW_MULT * _ROW_MULT)

    nblk = pl.cdiv(rows, target_rows)
    if slab_bytes > _MIN_SPLIT_BYTES:
        nblk = max(nblk, 2)                 # use both TensorCores on megacore parts
    if nblk > 1 and nblk % 2 == 1:
        nblk += 1                           # even block count -> balanced TC split

    block_rows = pl.cdiv(pl.cdiv(rows, nblk), _ROW_MULT) * _ROW_MULT
    if block_rows >= rows:
        return rows, 1                      # whole slab as one block (always legal)
    return block_rows, pl.cdiv(rows, block_rows)


def relu_pallas(x: jax.Array, *,
                target_block_bytes: int | None = None,
                donate: bool = False) -> jax.Array:
    """Elementwise ReLU with the hot loop inside a Pallas TPU kernel."""
    orig_shape = x.shape
    orig_dtype = x.dtype
    n = x.size
    if n == 0:
        return x

    itemsize = jnp.dtype(orig_dtype).itemsize
    width = _pick_width(n, itemsize)
    if width is None:
        # Ragged size (no multiple-of-128 factor): pad + slice would cost ~3x
        # the ideal HBM traffic, so just let XLA's fused maximum handle it.
        return jnp.maximum(x, jnp.zeros((), dtype=orig_dtype))

    rows = n // width
    slab = x.reshape(rows, width)

    if target_block_bytes is None:
        target_block_bytes = _default_block_bytes()
    block_rows, grid_n = _pick_blocking(rows, width, itemsize, target_block_bytes)

    # Double-buffered footprint: 2 arrays x 2 buffers x block.  Set the scoped
    # VMEM limit explicitly (capped well under v7x's 64 MiB physical VMEM).
    actual_block_bytes = block_rows * width * itemsize
    vmem_limit = min(48 * _MIB, 4 * actual_block_bytes + 16 * _MIB)

    out_slab = pl.pallas_call(
        _relu_kernel,
        out_shape=jax.ShapeDtypeStruct((rows, width), orig_dtype),
        grid_spec=pltpu.PrefetchScalarGridSpec(
            num_scalar_prefetch=0,
            grid=(grid_n,),
            in_specs=[pl.BlockSpec((block_rows, width), lambda i: (i, 0))],
            out_specs=pl.BlockSpec((block_rows, width), lambda i: (i, 0)),
        ),
        compiler_params=pltpu.CompilerParams(
            # Shards the row-tile axis across both TensorCores on v7x; no-op
            # on single-TC v5e/v6e.
            dimension_semantics=("parallel",),
            vmem_limit_bytes=vmem_limit,
        ),
        input_output_aliases=({0: 0} if donate else {}),
    )(slab)

    return out_slab.reshape(orig_shape)


if __name__ == "__main__":
    key = jax.random.PRNGKey(0)

    # Primary check: small NCHW input matching typical PyTorch usage.
    x = jax.random.normal(key, (2, 4, 16, 16), dtype=jnp.float32)
    y = jax.block_until_ready(relu_pallas(x))
    y_ref = jnp.maximum(x, 0.0)
    assert y.shape == x.shape and y.dtype == x.dtype
    assert bool(jnp.all(y == y_ref))

    # Secondary check: exercises the multi-block, megacore-split path.
    k1, k2 = jax.random.split(key)
    x2 = jax.random.normal(k1, (2, 8, 128, 256), dtype=jnp.float32)
    y2 = jax.block_until_ready(relu_pallas(x2))
    assert bool(jnp.all(y2 == jnp.maximum(x2, 0.0)))

    # Ragged check: exercises the pure-jnp fallback (no pad/slice HBM passes).
    x3 = jax.random.normal(k2, (3, 5, 7, 11), dtype=jnp.float32)
    y3 = jax.block_until_ready(relu_pallas(x3))
    assert bool(jnp.all(y3 == jnp.maximum(x3, 0.0)))

    # Donated-input path (caller doesn't need x afterwards).
    x4 = jax.random.normal(k2, (4, 4, 32, 32), dtype=jnp.float32)
    x4_ref = jnp.maximum(x4, 0.0)
    y4 = jax.block_until_ready(relu_pallas(x4, donate=True))
    assert bool(jnp.all(y4 == x4_ref))

    print("KERNEL_OK")
</pallas_src>

<mosaic_0001>
module attributes {stable_mosaic.version = 11 : i64} {
  func.func @_relu_kernel(%arg0: i32, %arg1: memref<8x256xf32, #tpu.memory_space<vmem>>, %arg2: memref<8x256xf32, #tpu.memory_space<vmem>>) attributes {dimension_semantics = [#tpu.dimension_semantics<parallel>], iteration_bounds = array<i64: 1>, scalar_prefetch = 0 : i64, scratch_operands = 0 : i64, tpu.core_type = #tpu.core_type<tc>, window_params = [{transform_indices = @transform_0, window_bounds = array<i64: 8, 256>}, {transform_indices = @transform_1, window_bounds = array<i64: 8, 256>}]} {
    %c0 = arith.constant 0 : index
    %c0_0 = arith.constant 0 : index
    %0 = vector.load %arg1[%c0, %c0_0] : memref<8x256xf32, #tpu.memory_space<vmem>>, vector<8x256xf32>
    %cst = arith.constant 0.000000e+00 : f32
    %1 = vector.broadcast %cst : f32 to vector<8x256xf32>
    %2 = arith.maximumf %0, %1 : vector<8x256xf32>
    %c0_1 = arith.constant 0 : index
    %c0_2 = arith.constant 0 : index
    %3 = vector.load %arg2[%c0_1, %c0_2] : memref<8x256xf32, #tpu.memory_space<vmem>>, vector<8x256xf32>
    tpu.vector_store %arg2[%c0_1, %c0_2], %2 {strides = array<i32>} : memref<8x256xf32, #tpu.memory_space<vmem>>, vector<8x256xf32>,
    return
  }
  func.func @transform_0(%arg0: i32) -> (i32, i32) {
    %c0_i32 = arith.constant 0 : i32
    %c0_i32_0 = arith.constant 0 : i32
    return %arg0, %c0_i32 : i32, i32
  }
  func.func @transform_1(%arg0: i32) -> (i32, i32) {
    %c0_i32 = arith.constant 0 : i32
    %c0_i32_0 = arith.constant 0 : i32
    return %arg0, %c0_i32 : i32, i32
  }
}

</mosaic_0001>

<llo_original>
// kernel: tpu_custom_call.1
$region0: #{tpu_custom_call.1}
  #allocation0 [shape = 'u32[]', space=smem, size = 0x4, offset = 0x4, fixed_abs, tag = 'smem constant byte address 0x4 - core index']
  #allocation1 [shape = 'u32[144,128]{1,0:T(1,128)}', space=vmem, size = 0x12000, scoped, tag = 'internal scratch']
  %s0 = inlined_call_operand.hbm [shape: f32[8,256], index: 0, kind: input, shape index: {}]
  %s1 = inlined_call_operand.hbm [shape: f32[8,256], index: 1, kind: output, shape index: {}]
  %s2 = sld [smem:[#allocation0]]
  $region18: #{tpu_custom_call.1} parent=0
    _
  %s4 = ssub.s32 1, %s2
  %s5 = scalar_select 0, %s4, %s2
  $region1: #{tpu_custom_call.1} parent=0
    #allocation2 [shape = 'u8[8192]{0}', space=vmem, size = 0x2000, scoped, tag = 'input window, operand 0, single buffered']
    #allocation3 [shape = 's32[1]{0}', space=sflag, size = 0x4, scoped, tag = 'scoped memory for tpu_custom_call.1']
    #allocation4 [shape = 's32[1]{0}', space=sflag, size = 0x4, scoped, tag = 'scoped memory for tpu_custom_call.1']
    #allocation5 [shape = 'u8[8192]{0}', space=vmem, size = 0x2000, scoped, tag = 'output window, operand 0, single buffered']
    %6 = vsyncpa [#allocation3], 0
    %7 = vsyncpa [#allocation4], 0
    // Predicated region
    $region2: #{tpu_custom_call.1} parent=1 // pred_check
      _
    $region3: #{tpu_custom_call.1} parent=1 // pred_check_branch
      %9 = sbr.rel (0) target = $region5
    $region4: #{tpu_custom_call.1} parent=1 // pred_region
      %s11 = ssub.s32 256, 256
      %12 = vsyncadd [#allocation3], %s11
      %s14 = sshll.u32 [#allocation2], 4
      %s15 = int_to_ptr.vmem [resolvable:$true] %s14
      %17 = dma.hbm_to_vmem [thread:$0]  %s0, 256, %s15, [#allocation3]
    $region5: #{tpu_custom_call.1} parent=1 // pred_fallthru
      _
    // Predicated region
    $region6: #{tpu_custom_call.1} parent=1 // pred_check
      _
    $region7: #{tpu_custom_call.1} parent=1 // pred_check_branch
      %19 = sbr.rel (0) target = $region9
    $region8: #{tpu_custom_call.1} parent=1 // pred_region
      %20 = dma.done [#allocation3], 256
    $region9: #{tpu_custom_call.1} parent=1 // pred_fallthru
      _
    %v21 = vld [vmem:[#allocation2] sm:$0xff]
    %v22 = vld [vmem:[#allocation2 + $0x8] sm:$0xff]
    %v23 = vmax.f32 %v21, 0.0
    %v24 = vmax.f32 %v22, 0.0
    %25 = vst [vmem:[#allocation5] sm:$0xff] %v23
    %26 = vst [vmem:[#allocation5 + $0x8] sm:$0xff] %v24
    // Predicated region
    $region10: #{tpu_custom_call.1} parent=1 // pred_check
      _
    $region11: #{tpu_custom_call.1} parent=1 // pred_check_branch
      %28 = sbr.rel (0) target = $region13
    $region12: #{tpu_custom_call.1} parent=1 // pred_region
      %s30 = ssub.s32 256, 256
      %31 = vsyncadd [#allocation4], %s30
      %s33 = sshll.u32 [#allocation5], 4
      %s34 = int_to_ptr.vmem [resolvable:$true] %s33
      %36 = dma.vmem_to_hbm [thread:$0]  %s34, 256, %s1, [#allocation4]
    $region13: #{tpu_custom_call.1} parent=1 // pred_fallthru
      _
    // Predicated region
    $region14: #{tpu_custom_call.1} parent=1 // pred_check
      _
    $region15: #{tpu_custom_call.1} parent=1 // pred_check_branch
      %38 = sbr.rel (0) target = $region17
    $region16: #{tpu_custom_call.1} parent=1 // pred_region
      %39 = dma.done [#allocation4], 256
    $region17: #{tpu_custom_call.1} parent=1 // pred_fallthru
      _
    %40 = vsyncpa [#allocation3], 1
    %41 = vsyncpa [#allocation4], 1

</llo_original>
